<compile_context>
chip_gen: v7x
topology: tpu7x:2x2x1
jax: 0.10.0
libtpu: 0.0.40
codegen_flags: <defaults>
</compile_context>

<pallas_src>
import jax
import jax.numpy as jnp
from jax.experimental import pallas as pl
from jax.experimental.pallas import tpu as pltpu


def _round_up(a: int, b: int) -> int:
    return -(-a // b) * b


def _dividing_tile(padded: int, desired: int, align: int) -> int:
    """Largest multiple of `align` that divides `padded` and is <= max(desired, align)."""
    nblk = padded // align
    max_d = max(1, min(nblk, max(desired, align) // align))
    for d in range(max_d, 0, -1):
        if nblk % d == 0:
            return d * align
    return align


def _hbf_kernel(x_ref, t_ref, nbww_ref, nbxx_ref, c_ref, o_ref):
    """One (TILE_M x TILE_DC) step of  y = exp(-beta*||x - center||^2) @ C^T.

    t has been pre-scaled by 2*beta, nbww = -beta*||t||^2 per center and
    nbxx = -beta*||x||^2 per row, so the exp argument is exactly -beta*Delta.
    """
    k = pl.program_id(1)

    # MXU: x @ (2*beta*t) -> (TILE_M, TILE_DC); exp-argument path kept in f32.
    xw = jnp.dot(x_ref[...], t_ref[...], preferred_element_type=jnp.float32)

    # 2 VPU adds feeding the EUP exp (2*beta multiply folded into t at prep time).
    kx = jnp.exp(xw + nbww_ref[...] + nbxx_ref[...])

    # MXU: Kx @ C^T with bf16 weights (kx in (0,1] so bf16 is numerically safe),
    # f32 accumulation straight into the resident output tile.
    contrib = jnp.dot(kx.astype(c_ref.dtype), c_ref[...],
                      preferred_element_type=jnp.float32)

    @pl.when(k == 0)
    def _():
        o_ref[...] = contrib

    @pl.when(k > 0)
    def _():
        o_ref[...] += contrib


def prepare_hbf_weights(t, c_weight_t, std, *, tile_dc=512, weights_in_bf16=True):
    """One-time weight-side prep (do this at parameter init, not per forward).

    t:          (D_prev, Dc)   centers, already transposed (the module's self.t)
    c_weight_t: (Dc, D_out)    C.weight.T  (Linear, bias=False)
    std:        python float
    """
    D_prev, Dc = t.shape
    dc2, D_out = c_weight_t.shape
    assert dc2 == Dc
    beta = (1.0 / float(std)) ** 2

    dc_pad = _round_up(Dc, 128)
    dout_pad = _round_up(D_out, 128)
    tile_dc = _dividing_tile(dc_pad, tile_dc, 128)

    t_p = jnp.pad(t.astype(jnp.float32), ((0, 0), (0, dc_pad - Dc)))
    nb_ww = (-beta) * jnp.sum(t_p * t_p, axis=0, keepdims=True)       # (1, dc_pad)
    t_scaled = (2.0 * beta) * t_p                                     # fold 2*beta into t

    c_dtype = jnp.bfloat16 if weights_in_bf16 else jnp.float32
    # Zero-padded rows/cols => padded Kx columns contribute exactly 0 to y.
    c_p = jnp.pad(c_weight_t.astype(jnp.float32),
                  ((0, dc_pad - Dc), (0, dout_pad - D_out))).astype(c_dtype)

    return dict(t=t_scaled, nb_ww=nb_ww, c=c_p, beta=beta,
                D_prev=D_prev, Dc=Dc, D_out=D_out,
                dc_pad=dc_pad, dout_pad=dout_pad, tile_dc=tile_dc)


def one_layer_hbf_apply(params, x, *, tile_m=512, vmem_budget_bytes=48 << 20):
    """Per-call forward: pad x, compute -beta*||x||^2, run the Pallas kernel."""
    M, D_prev = x.shape
    assert D_prev == params["D_prev"]
    beta = params["beta"]
    dc_pad, dout_pad, tile_dc = params["dc_pad"], params["dout_pad"], params["tile_dc"]

    # M tiling: pad only to the 8-row hardware minimum, pick a dividing tile.
    m_pad = _round_up(M, 8)
    tile_m = _dividing_tile(m_pad, tile_m, 8)
    # v7x megacore: keep >= 2 tiles on the "parallel" M axis when possible.
    if m_pad // tile_m < 2 and m_pad >= 16:
        tile_m = _dividing_tile(m_pad, tile_m // 2, 8)

    # Keep the double-buffered working set under the VMEM budget by shrinking
    # tile_dc (weight refetch is amortised by tile_m, so don't shrink tile_m).
    c_itemsize = params["c"].dtype.itemsize

    def footprint(tdc):
        return 2 * (tile_m * D_prev * 4          # x tile
                    + D_prev * tdc * 4           # 2*beta*t tile
                    + 8 * tdc * 4                # -beta*WW row (sublane-padded)
                    + tile_m * 128 * 4           # -beta*XX column (lane-padded)
                    + tdc * dout_pad * c_itemsize  # C^T tile
                    + tile_m * dout_pad * 4)     # resident output tile

    while footprint(tile_dc) > vmem_budget_bytes and tile_dc > 128:
        tile_dc = _dividing_tile(dc_pad, tile_dc // 2, 128)

    x_p = jnp.pad(x.astype(jnp.float32), ((0, m_pad - M), (0, 0)))
    nb_xx = (-beta) * jnp.sum(x_p * x_p, axis=1, keepdims=True)       # (m_pad, 1)

    grid = (m_pad // tile_m, dc_pad // tile_dc)
    vmem_limit = int(min(max(footprint(tile_dc) + (4 << 20), 16 << 20), 64 << 20))

    out = pl.pallas_call(
        _hbf_kernel,
        out_shape=jax.ShapeDtypeStruct((m_pad, dout_pad), jnp.float32),
        grid_spec=pltpu.PrefetchScalarGridSpec(
            num_scalar_prefetch=0,
            grid=grid,
            in_specs=[
                pl.BlockSpec((tile_m, D_prev), lambda i, k: (i, 0)),      # x tile
                pl.BlockSpec((D_prev, tile_dc), lambda i, k: (0, k)),     # 2*beta*t
                pl.BlockSpec((1, tile_dc), lambda i, k: (0, k)),          # -beta*WW
                pl.BlockSpec((tile_m, 1), lambda i, k: (i, 0)),           # -beta*XX
                pl.BlockSpec((tile_dc, dout_pad), lambda i, k: (k, 0)),   # C^T tile
            ],
            out_specs=pl.BlockSpec((tile_m, dout_pad), lambda i, k: (i, 0)),
        ),
        compiler_params=pltpu.CompilerParams(
            dimension_semantics=("parallel", "arbitrary"),
            vmem_limit_bytes=vmem_limit,
        ),
    )(x_p, params["t"], params["nb_ww"], nb_xx, params["c"])

    return out[:M, :params["D_out"]]


def one_layer_hbf(x, t, c_weight_t, std, *, tile_m=512, tile_dc=512,
                  weights_in_bf16=True):
    """Convenience wrapper: prep weights + apply (prefer caching the prep)."""
    params = prepare_hbf_weights(t, c_weight_t, std, tile_dc=tile_dc,
                                 weights_in_bf16=weights_in_bf16)
    return one_layer_hbf_apply(params, x, tile_m=tile_m)


def _reference(x, t, c_weight_t, std):
    beta = (1.0 / float(std)) ** 2
    ww = jnp.sum(t * t, axis=0, keepdims=True)
    xx = jnp.sum(x * x, axis=1, keepdims=True)
    delta = ww + xx - 2.0 * (x @ t)
    return jnp.exp(-beta * delta) @ c_weight_t


if __name__ == "__main__":
    key = jax.random.PRNGKey(0)
    k1, k2, k3, k4, k5, k6 = jax.random.split(key, 6)

    # ---- test 1: module-native tiny shapes, f32 weights, tight tolerance ----
    M, D_prev, Dc, D_out = 8, 32, 16, 8
    std = 6.0
    x = jax.random.normal(k1, (M, D_prev), dtype=jnp.float32)
    centers = jax.random.normal(k2, (Dc, D_prev), dtype=jnp.float32)   # as in __init__
    t = centers.T                                                      # self.t = centers.t()
    c_weight = jax.random.normal(k3, (D_out, Dc), dtype=jnp.float32) * 0.1
    c_weight_t = c_weight.T                                            # (Dc, D_out)

    y = jax.block_until_ready(
        one_layer_hbf(x, t, c_weight_t, std, weights_in_bf16=False))
    y_ref = _reference(x, t, c_weight_t, std)
    assert y.shape == (M, D_out)
    assert jnp.allclose(y, y_ref, atol=1e-5, rtol=1e-5), "mismatch (test 1, f32)"

    # ---- test 2: exercises M tiling, Dc reduction axis, padding/slicing -----
    M2, Dc2, D_out2, std2 = 300, 200, 24, 8.0
    x2 = jax.random.normal(k4, (M2, D_prev), dtype=jnp.float32)
    t2 = jax.random.normal(k5, (Dc2, D_prev), dtype=jnp.float32).T
    c2 = (jax.random.normal(k6, (D_out2, Dc2), dtype=jnp.float32) * 0.1).T
    y2_ref = _reference(x2, t2, c2, std2)

    # 2a: f32 weights -> exact-path check with tight tolerance.
    params_f32 = prepare_hbf_weights(t2, c2, std2, tile_dc=512, weights_in_bf16=False)
    y2_f32 = jax.block_until_ready(one_layer_hbf_apply(params_f32, x2, tile_m=512))
    assert y2_f32.shape == (M2, D_out2)
    assert jnp.allclose(y2_f32, y2_ref, atol=1e-4, rtol=1e-4), "mismatch (test 2, f32)"

    # 2b: bf16 C^T / bf16 Kx feeding the second MXU matmul (f32 accumulate).
    params_bf16 = prepare_hbf_weights(t2, c2, std2, tile_dc=512, weights_in_bf16=True)
    y2_bf16 = jax.block_until_ready(one_layer_hbf_apply(params_bf16, x2, tile_m=512))
    assert y2_bf16.shape == (M2, D_out2)
    assert jnp.allclose(y2_bf16, y2_ref, atol=3e-2, rtol=3e-2), "mismatch (test 2, bf16)"

    print("KERNEL_OK")
</pallas_src>

<mosaic_0001>
module attributes {stable_mosaic.version = 11 : i64} {
  func.func @_hbf_kernel(%arg0: i32, %arg1: i32, %arg2: memref<8x32xf32, #tpu.memory_space<vmem>>, %arg3: memref<32x128xf32, #tpu.memory_space<vmem>>, %arg4: memref<1x128xf32, #tpu.memory_space<vmem>>, %arg5: memref<8x1xf32, #tpu.memory_space<vmem>>, %arg6: memref<128x128xf32, #tpu.memory_space<vmem>>, %arg7: memref<8x128xf32, #tpu.memory_space<vmem>>) attributes {dimension_semantics = [#tpu.dimension_semantics<parallel>, #tpu.dimension_semantics<arbitrary>], iteration_bounds = array<i64: 1, 1>, scalar_prefetch = 0 : i64, scratch_operands = 0 : i64, tpu.core_type = #tpu.core_type<tc>, window_params = [{transform_indices = @transform_0, window_bounds = array<i64: 8, 32>}, {transform_indices = @transform_1, window_bounds = array<i64: 32, 128>}, {transform_indices = @transform_2, window_bounds = array<i64: 1, 128>}, {transform_indices = @transform_3, window_bounds = array<i64: 8, 1>}, {transform_indices = @transform_4, window_bounds = array<i64: 128, 128>}, {transform_indices = @transform_5, window_bounds = array<i64: 8, 128>}]} {
    %c0 = arith.constant 0 : index
    %c0_0 = arith.constant 0 : index
    %0 = vector.load %arg2[%c0, %c0_0] : memref<8x32xf32, #tpu.memory_space<vmem>>, vector<8x32xf32>
    %c0_1 = arith.constant 0 : index
    %c0_2 = arith.constant 0 : index
    %1 = vector.load %arg3[%c0_1, %c0_2] : memref<32x128xf32, #tpu.memory_space<vmem>>, vector<32x128xf32>
    %cst = arith.constant dense<0.000000e+00> : vector<8x128xf32>
    %2 = tpu.matmul %0, %1, %cst {dimension_numbers = #tpu.dot_dimension_numbers<[1], [0], [0], [1], [0, 0, 1, 1], [], []>} : vector<8x32xf32>, vector<32x128xf32>, vector<8x128xf32> -> vector<8x128xf32>
    %c0_3 = arith.constant 0 : index
    %c0_4 = arith.constant 0 : index
    %3 = vector.load %arg4[%c0_3, %c0_4] : memref<1x128xf32, #tpu.memory_space<vmem>>, vector<1x128xf32>
    %4 = vector.broadcast %3 : vector<1x128xf32> to vector<8x128xf32>
    %5 = arith.addf %2, %4 : vector<8x128xf32>
    %c0_5 = arith.constant 0 : index
    %c0_6 = arith.constant 0 : index
    %6 = vector.load %arg5[%c0_5, %c0_6] : memref<8x1xf32, #tpu.memory_space<vmem>>, vector<8x1xf32>
    %7 = vector.broadcast %6 : vector<8x1xf32> to vector<8x128xf32>
    %8 = arith.addf %5, %7 : vector<8x128xf32>
    %9 = math.exp %8 : vector<8x128xf32>
    %c0_7 = arith.constant 0 : index
    %c0_8 = arith.constant 0 : index
    %10 = vector.load %arg6[%c0_7, %c0_8] : memref<128x128xf32, #tpu.memory_space<vmem>>, vector<128x128xf32>
    %cst_9 = arith.constant dense<0.000000e+00> : vector<8x128xf32>
    %11 = tpu.matmul %9, %10, %cst_9 {dimension_numbers = #tpu.dot_dimension_numbers<[1], [0], [0], [1], [0, 0, 1, 1], [], []>} : vector<8x128xf32>, vector<128x128xf32>, vector<8x128xf32> -> vector<8x128xf32>
    %c0_i32 = arith.constant 0 : i32
    %12 = arith.cmpi eq, %arg1, %c0_i32 : i32
    %13 = arith.extui %12 : i1 to i32
    %c0_i32_10 = arith.constant 0 : i32
    %14 = arith.cmpi ne, %13, %c0_i32_10 : i32
    scf.if %14 {
      %c0_13 = arith.constant 0 : index
      %c0_14 = arith.constant 0 : index
      %18 = vector.load %arg7[%c0_13, %c0_14] : memref<8x128xf32, #tpu.memory_space<vmem>>, vector<8x128xf32>
      tpu.vector_store %arg7[%c0_13, %c0_14], %11 {strides = array<i32>} : memref<8x128xf32, #tpu.memory_space<vmem>>, vector<8x128xf32>,
    } else {
    }
    %c0_i32_11 = arith.constant 0 : i32
    %15 = arith.cmpi sgt, %arg1, %c0_i32_11 : i32
    %16 = arith.extui %15 : i1 to i32
    %c0_i32_12 = arith.constant 0 : i32
    %17 = arith.cmpi ne, %16, %c0_i32_12 : i32
    scf.if %17 {
      %c0_13 = arith.constant 0 : index
      %c0_14 = arith.constant 0 : index
      %18 = vector.load %arg7[%c0_13, %c0_14] : memref<8x128xf32, #tpu.memory_space<vmem>>, vector<8x128xf32>
      %19 = arith.addf %18, %11 : vector<8x128xf32>
      %c0_15 = arith.constant 0 : index
      %c0_16 = arith.constant 0 : index
      %20 = vector.load %arg7[%c0_15, %c0_16] : memref<8x128xf32, #tpu.memory_space<vmem>>, vector<8x128xf32>
      tpu.vector_store %arg7[%c0_15, %c0_16], %19 {strides = array<i32>} : memref<8x128xf32, #tpu.memory_space<vmem>>, vector<8x128xf32>,
    } else {
    }
    return
  }
  func.func @transform_0(%arg0: i32, %arg1: i32) -> (i32, i32) {
    %c0_i32 = arith.constant 0 : i32
    %c0_i32_0 = arith.constant 0 : i32
    return %arg0, %c0_i32 : i32, i32
  }
  func.func @transform_1(%arg0: i32, %arg1: i32) -> (i32, i32) {
    %c0_i32 = arith.constant 0 : i32
    %c0_i32_0 = arith.constant 0 : i32
    return %c0_i32, %arg1 : i32, i32
  }
  func.func @transform_2(%arg0: i32, %arg1: i32) -> (i32, i32) {
    %c0_i32 = arith.constant 0 : i32
    %c0_i32_0 = arith.constant 0 : i32
    return %c0_i32, %arg1 : i32, i32
  }
  func.func @transform_3(%arg0: i32, %arg1: i32) -> (i32, i32) {
    %c0_i32 = arith.constant 0 : i32
    %c0_i32_0 = arith.constant 0 : i32
    return %arg0, %c0_i32 : i32, i32
  }
  func.func @transform_4(%arg0: i32, %arg1: i32) -> (i32, i32) {
    %c0_i32 = arith.constant 0 : i32
    %c0_i32_0 = arith.constant 0 : i32
    return %arg1, %c0_i32 : i32, i32
  }
  func.func @transform_5(%arg0: i32, %arg1: i32) -> (i32, i32) {
    %c0_i32 = arith.constant 0 : i32
    %c0_i32_0 = arith.constant 0 : i32
    return %arg0, %c0_i32 : i32, i32
  }
}

</mosaic_0001>

<llo_original>
// kernel: tpu_custom_call.1
$region0: #{tpu_custom_call.1}
  #allocation0 [shape = 'u32[]', space=smem, size = 0x4, offset = 0x4, fixed_abs, tag = 'smem constant byte address 0x4 - core index']
  #allocation1 [shape = 'u32[144,128]{1,0:T(1,128)}', space=vmem, size = 0x12000, scoped, tag = 'internal scratch']
  %s0 = inlined_call_operand.vmem [shape: f32[8,32], index: 0, kind: input, shape index: {}]
  %s1 = inlined_call_operand.hbm [shape: f32[32,128], index: 1, kind: input, shape index: {}]
  %s2 = inlined_call_operand.vmem [shape: f32[1,128], index: 2, kind: input, shape index: {}]
  %s3 = inlined_call_operand.vmem [shape: f32[8,1], index: 3, kind: input, shape index: {}]
  %s4 = inlined_call_operand.hbm [shape: f32[128,128], index: 4, kind: input, shape index: {}]
  %s5 = inlined_call_operand.hbm [shape: f32[8,128], index: 5, kind: output, shape index: {}]
  %s6 = sld [smem:[#allocation0]]
  $region46: #{tpu_custom_call.1} parent=0
    _
  %s8 = ssub.s32 1, %s6
  %s9 = scalar_select 0, %s8, %s6
  $region1: #{tpu_custom_call.1} parent=0
    #allocation2 [shape = 'u8[16384]{0}', space=vmem, size = 0x4000, scoped, tag = 'input window, operand 1, single buffered']
    #allocation3 [shape = 's32[1]{0}', space=sflag, size = 0x4, scoped, tag = 'scoped memory for tpu_custom_call.1']
    #allocation4 [shape = 's32[1]{0}', space=sflag, size = 0x4, scoped, tag = 'scoped memory for tpu_custom_call.1']
    #allocation5 [shape = 'u8[65536]{0}', space=vmem, size = 0x10000, scoped, tag = 'input window, operand 4, single buffered']
    #allocation6 [shape = 's32[1]{0}', space=sflag, size = 0x4, scoped, tag = 'scoped memory for tpu_custom_call.1']
    #allocation7 [shape = 'u8[4096]{0}', space=vmem, size = 0x1000, scoped, tag = 'output window, operand 0, single buffered']
    %10 = vsyncpa [#allocation3], 0
    %11 = vsyncpa [#allocation6], 0
    %12 = vsyncpa [#allocation4], 0
    // Predicated region
    $region2: #{tpu_custom_call.1} parent=1 // pred_check
      _
    $region3: #{tpu_custom_call.1} parent=1 // pred_check_branch
      %14 = sbr.rel (0) target = $region5
    $region4: #{tpu_custom_call.1} parent=1 // pred_region
      _
    $region5: #{tpu_custom_call.1} parent=1 // pred_fallthru
      _
    // Predicated region
    $region6: #{tpu_custom_call.1} parent=1 // pred_check
      _
    $region7: #{tpu_custom_call.1} parent=1 // pred_check_branch
      %16 = sbr.rel (0) target = $region9
    $region8: #{tpu_custom_call.1} parent=1 // pred_region
      %s18 = ssub.s32 512, 512
      %19 = vsyncadd [#allocation3], %s18
      %s20 = sshll.u32 [#allocation2], 4
      %s21 = int_to_ptr.vmem [resolvable:$true] %s20
      %26 = dma.hbm_to_vmem [thread:$0]  %s1, 512, %s21, [#allocation3], 128, 128, 8
    $region9: #{tpu_custom_call.1} parent=1 // pred_fallthru
      _
    // Predicated region
    $region10: #{tpu_custom_call.1} parent=1 // pred_check
      _
    $region11: #{tpu_custom_call.1} parent=1 // pred_check_branch
      %28 = sbr.rel (0) target = $region13
    $region12: #{tpu_custom_call.1} parent=1 // pred_region
      _
    $region13: #{tpu_custom_call.1} parent=1 // pred_fallthru
      _
    // Predicated region
    $region14: #{tpu_custom_call.1} parent=1 // pred_check
      _
    $region15: #{tpu_custom_call.1} parent=1 // pred_check_branch
      %30 = sbr.rel (0) target = $region17
    $region16: #{tpu_custom_call.1} parent=1 // pred_region
      _
    $region17: #{tpu_custom_call.1} parent=1 // pred_fallthru
      _
    // Predicated region
    $region18: #{tpu_custom_call.1} parent=1 // pred_check
      _
    $region19: #{tpu_custom_call.1} parent=1 // pred_check_branch
      %32 = sbr.rel (0) target = $region21
    $region20: #{tpu_custom_call.1} parent=1 // pred_region
      %s34 = ssub.s32 2048, 2048
      %35 = vsyncadd [#allocation6], %s34
      %s36 = sshll.u32 [#allocation5], 4
      %s37 = int_to_ptr.vmem [resolvable:$true] %s36
      %42 = dma.hbm_to_vmem [thread:$0]  %s4, 2048, %s37, [#allocation6], 128, 128, 8
    $region21: #{tpu_custom_call.1} parent=1 // pred_fallthru
      _
    // Predicated region
    $region22: #{tpu_custom_call.1} parent=1 // pred_check
      _
    $region23: #{tpu_custom_call.1} parent=1 // pred_check_branch
      %44 = sbr.rel (0) target = $region25
    $region24: #{tpu_custom_call.1} parent=1 // pred_region
      %45 = dma.done [#allocation3], 512
    $region25: #{tpu_custom_call.1} parent=1 // pred_fallthru
      _
    // Predicated region
    $region26: #{tpu_custom_call.1} parent=1 // pred_check
      _
    $region27: #{tpu_custom_call.1} parent=1 // pred_check_branch
      %47 = sbr.rel (0) target = $region29
    $region28: #{tpu_custom_call.1} parent=1 // pred_region
      %48 = dma.done [#allocation6], 2048
    $region29: #{tpu_custom_call.1} parent=1 // pred_fallthru
      _
    %v49 = vld [vmem:[%s0] sm:$0xff]
    %v50 = vld [vmem:[#allocation2] sm:$0xff]
    %v51 = vld [vmem:[#allocation2 + $0x8] sm:$0xff]
    %v52 = vld [vmem:[#allocation2 + $0x10] sm:$0xff]
    %v53 = vld [vmem:[#allocation2 + $0x18] sm:$0xff]
    %v54 = vld [vmem:[%s2] sm:$0x1]
    %v56 = vlaneseq
    %v57 = vshrl.u32 %v56, 7
    %v58 = vsub.s32 0, %v57
    %v59 = vrot.slane %v54, %v58
    %vm61 = vcmask 261120
    %v63 = vsel %vm61, %v49, 0
    %65 = vmatprep.subr.mxu0 0.0
    %66 = vmatpush1.msra.mxu0 %v50
    %67 = vmatprep.subr.mxu0 0.0
    %68 = vmatpush1.msra.mxu0 %v51
    %69 = vmatprep.subr.mxu0 0.0
    %70 = vmatpush1.msra.mxu0 %v52
    %71 = vmatprep.subr.mxu0 0.0
    %72 = vmatpush1.msra.mxu0 %v53
    %73 = vmatprep.subr.mxu0 0.0
    %74 = vmatpush1.msra.mxu0 0.0
    %75 = vmatprep.subr.mxu0 0.0
    %76 = vmatpush1.msra.mxu0 0.0
    %77 = vmatprep.subr.mxu0 0.0
    %78 = vmatpush1.msra.mxu0 0.0
    %79 = vmatprep.subr.mxu0 0.0
    %80 = vmatpush1.msra.mxu0 0.0
    %81 = vmatprep.subr.mxu0 0.0
    %82 = vmatpush1.msra.mxu0 0.0
    %83 = vmatprep.subr.mxu0 0.0
    %84 = vmatpush1.msra.mxu0 0.0
    %85 = vmatprep.subr.mxu0 0.0
    %86 = vmatpush1.msra.mxu0 0.0
    %87 = vmatprep.subr.mxu0 0.0
    %88 = vmatpush1.msra.mxu0 0.0
    %89 = vmatprep.subr.mxu0 0.0
    %90 = vmatpush1.msra.mxu0 0.0
    %91 = vmatprep.subr.mxu0 0.0
    %92 = vmatpush1.msra.mxu0 0.0
    %93 = vmatprep.subr.mxu0 0.0
    %94 = vmatpush1.msra.mxu0 0.0
    %95 = vmatprep.subr.mxu0 0.0
    %96 = vmatpush1.msra.mxu0 0.0
    %97 = vmatprep.subr.mxu0 0.0
    %98 = vmatpush1.msra.mxu0 0.0
    %99 = vmatprep.subr.mxu0 0.0
    %100 = vmatpush1.msra.mxu0 0.0
    %101 = vmatprep.subr.mxu0 0.0
    %102 = vmatpush1.msra.mxu0 0.0
    %103 = vmatprep.subr.mxu0 0.0
    %104 = vmatpush1.msra.mxu0 0.0
    %105 = vmatprep.subr.mxu0 0.0
    %106 = vmatpush1.msra.mxu0 0.0
    %107 = vmatprep.subr.mxu0 0.0
    %108 = vmatpush1.msra.mxu0 0.0
    %109 = vmatprep.subr.mxu0 0.0
    %110 = vmatpush1.msra.mxu0 0.0
    %111 = vmatprep.subr.mxu0 0.0
    %112 = vmatpush1.msra.mxu0 0.0
    %113 = vmatprep.subr.mxu0 0.0
    %114 = vmatpush1.msra.mxu0 0.0
    %115 = vmatprep.subr.mxu0 0.0
    %116 = vmatpush1.msra.mxu0 0.0
    %117 = vmatprep.subr.mxu0 0.0
    %118 = vmatpush1.msra.mxu0 0.0
    %119 = vmatprep.subr.mxu0 0.0
    %120 = vmatpush1.msra.mxu0 0.0
    %121 = vmatprep.subr.mxu0 0.0
    %122 = vmatpush1.msra.mxu0 0.0
    %123 = vmatprep.subr.mxu0 0.0
    %124 = vmatpush1.msra.mxu0 0.0
    %125 = vmatprep.subr.mxu0 0.0
    %126 = vmatpush1.msra.mxu0 0.0
    %127 = vmatprep.subr.mxu0 0.0
    %128 = vmatpush1.msra.mxu0 0.0
    %129 = vmatprep.mubr.f32.mxu0 0.0
    %130 = vmatmul.mubr.f32.gmra.mrb[0].mxu0 %v63
    %v131 = vpop.f32.mrb[0].mxu0
    %v132 = vadd.f32 %v59, %v131
    %v133 = vpop.f32.mrb[0].mxu0
    %134 = vdwg.mxu0
    %v135 = vld [vmem:[%s3] sm:$0xff]
    %137 = vset.pattern.permute.xlu0 0
    %138 = vperm.xlu0 %137, %v135
    %v139 = vpop.permute.xlu0 %138
    %v141 = vadd.f32 %v132, %v139
    %v142 = vmul.f32 %v141, 1.442695
    %v143 = vpow.pop %v142
    %v144 = vld [vmem:[#allocation5] sm:$0xff]
    %v145 = vld [vmem:[#allocation5 + $0x8] sm:$0xff]
    %v146 = vld [vmem:[#allocation5 + $0x10] sm:$0xff]
    %v147 = vld [vmem:[#allocation5 + $0x18] sm:$0xff]
    %v148 = vld [vmem:[#allocation5 + $0x20] sm:$0xff]
    %v149 = vld [vmem:[#allocation5 + $0x28] sm:$0xff]
    %v150 = vld [vmem:[#allocation5 + $0x30] sm:$0xff]
    %v151 = vld [vmem:[#allocation5 + $0x38] sm:$0xff]
    %v152 = vld [vmem:[#allocation5 + $0x40] sm:$0xff]
    %v153 = vld [vmem:[#allocation5 + $0x48] sm:$0xff]
    %v154 = vld [vmem:[#allocation5 + $0x50] sm:$0xff]
    %v155 = vld [vmem:[#allocation5 + $0x58] sm:$0xff]
    %v156 = vld [vmem:[#allocation5 + $0x60] sm:$0xff]
    %v157 = vld [vmem:[#allocation5 + $0x68] sm:$0xff]
    %v158 = vld [vmem:[#allocation5 + $0x70] sm:$0xff]
    %v159 = vld [vmem:[#allocation5 + $0x78] sm:$0xff]
    %160 = vmatprep.subr.mxu0 0.0
    %161 = vmatpush1.msra.mxu0 %v144
    %162 = vmatprep.subr.mxu0 0.0
    %163 = vmatpush1.msra.mxu0 %v145
    %164 = vmatprep.subr.mxu0 0.0
    %165 = vmatpush1.msra.mxu0 %v146
    %166 = vmatprep.subr.mxu0 0.0
    %167 = vmatpush1.msra.mxu0 %v147
    %168 = vmatprep.subr.mxu0 0.0
    %169 = vmatpush1.msra.mxu0 %v148
    %170 = vmatprep.subr.mxu0 0.0
    %171 = vmatpush1.msra.mxu0 %v149
    %172 = vmatprep.subr.mxu0 0.0
    %173 = vmatpush1.msra.mxu0 %v150
    %174 = vmatprep.subr.mxu0 0.0
    %175 = vmatpush1.msra.mxu0 %v151
    %176 = vmatprep.subr.mxu0 0.0
    %177 = vmatpush1.msra.mxu0 %v152
    %178 = vmatprep.subr.mxu0 0.0
    %179 = vmatpush1.msra.mxu0 %v153
    %180 = vmatprep.subr.mxu0 0.0
    %181 = vmatpush1.msra.mxu0 %v154
    %182 = vmatprep.subr.mxu0 0.0
    %183 = vmatpush1.msra.mxu0 %v155
    %184 = vmatprep.subr.mxu0 0.0
    %185 = vmatpush1.msra.mxu0 %v156
    %186 = vmatprep.subr.mxu0 0.0
    %187 = vmatpush1.msra.mxu0 %v157
    %188 = vmatprep.subr.mxu0 0.0
    %189 = vmatpush1.msra.mxu0 %v158
    %190 = vmatprep.subr.mxu0 0.0
    %191 = vmatpush1.msra.mxu0 %v159
    %192 = vmatprep.subr.mxu0 0.0
    %193 = vmatpush1.msra.mxu0 0.0
    %194 = vmatprep.subr.mxu0 0.0
    %195 = vmatpush1.msra.mxu0 0.0
    %196 = vmatprep.subr.mxu0 0.0
    %197 = vmatpush1.msra.mxu0 0.0
    %198 = vmatprep.subr.mxu0 0.0
    %199 = vmatpush1.msra.mxu0 0.0
    %200 = vmatprep.subr.mxu0 0.0
    %201 = vmatpush1.msra.mxu0 0.0
    %202 = vmatprep.subr.mxu0 0.0
    %203 = vmatpush1.msra.mxu0 0.0
    %204 = vmatprep.subr.mxu0 0.0
    %205 = vmatpush1.msra.mxu0 0.0
    %206 = vmatprep.subr.mxu0 0.0
    %207 = vmatpush1.msra.mxu0 0.0
    %208 = vmatprep.subr.mxu0 0.0
    %209 = vmatpush1.msra.mxu0 0.0
    %210 = vmatprep.subr.mxu0 0.0
    %211 = vmatpush1.msra.mxu0 0.0
    %212 = vmatprep.subr.mxu0 0.0
    %213 = vmatpush1.msra.mxu0 0.0
    %214 = vmatprep.subr.mxu0 0.0
    %215 = vmatpush1.msra.mxu0 0.0
    %216 = vmatprep.subr.mxu0 0.0
    %217 = vmatpush1.msra.mxu0 0.0
    %218 = vmatprep.subr.mxu0 0.0
    %219 = vmatpush1.msra.mxu0 0.0
    %220 = vmatprep.subr.mxu0 0.0
    %221 = vmatpush1.msra.mxu0 0.0
    %222 = vmatprep.subr.mxu0 0.0
    %223 = vmatpush1.msra.mxu0 0.0
    %224 = vmatprep.mubr.f32.mxu0 0.0
    %225 = vmatmul.mubr.f32.gmra.mrb[0].mxu0 %v143
    %v226 = vpop.f32.mrb[0].mxu0
    %v227 = vadd.f32 0.0, %v226
    %v228 = vpop.f32.mrb[0].mxu0
    %229 = vdwg.mxu0
    %p230 = scmp.eq.s32.totalorder 0, 0
    // Predicated region
    $region30: #{tpu_custom_call.1} parent=1 // pred_check
      %p231 = pneg %p230
    $region31: #{tpu_custom_call.1} parent=1 // pred_check_branch
      %233 = sbr.rel (%p231) target = $region33
    $region32: #{tpu_custom_call.1} parent=1 // pred_region
      %234 = vst [vmem:[#allocation7] sm:$0xff] %v227
    $region33: #{tpu_custom_call.1} parent=1 // pred_fallthru
      _
    %p235 = scmp.gt.s32.totalorder 0, 0
    // Predicated region
    $region34: #{tpu_custom_call.1} parent=1 // pred_check
      %p236 = pneg %p235
    $region35: #{tpu_custom_call.1} parent=1 // pred_check_branch
      %238 = sbr.rel (%p236) target = $region37
    $region36: #{tpu_custom_call.1} parent=1 // pred_region
      %v239 = vld [vmem:[#allocation7] sm:$0xff]
      %v240 = vadd.f32 %v239, %v227
      %241 = vst [vmem:[#allocation7] sm:$0xff] %v240
    $region37: #{tpu_custom_call.1} parent=1 // pred_fallthru
      _
    // Predicated region
    $region38: #{tpu_custom_call.1} parent=1 // pred_check
      _
    $region39: #{tpu_custom_call.1} parent=1 // pred_check_branch
      %243 = sbr.rel (0) target = $region41
    $region40: #{tpu_custom_call.1} parent=1 // pred_region
      %s245 = ssub.s32 128, 128
      %246 = vsyncadd [#allocation4], %s245
      %s248 = sshll.u32 [#allocation7], 4
      %s249 = int_to_ptr.vmem [resolvable:$true] %s248
      %251 = dma.vmem_to_hbm [thread:$0]  %s249, 128, %s5, [#allocation4]
    $region41: #{tpu_custom_call.1} parent=1 // pred_fallthru
      _
    // Predicated region
    $region42: #{tpu_custom_call.1} parent=1 // pred_check
      _
    $region43: #{tpu_custom_call.1} parent=1 // pred_check_branch
      %253 = sbr.rel (0) target = $region45
    $region44: #{tpu_custom_call.1} parent=1 // pred_region
      %254 = dma.done [#allocation4], 128
    $region45: #{tpu_custom_call.1} parent=1 // pred_fallthru
      _
    %255 = vsyncpa [#allocation3], 1
    %256 = vsyncpa [#allocation6], 1
    %257 = vsyncpa [#allocation4], 1

</llo_original>
